<compile_context>
chip_gen: v7x
topology: tpu7x:2x2x1
jax: 0.10.0
libtpu: 0.0.40
codegen_flags: <defaults>
</compile_context>

<pallas_src>
import functools

import jax
import jax.numpy as jnp
from jax.experimental import pallas as pl
from jax.experimental.pallas import tpu as pltpu

LN_EPS = 1e-5  # PyTorch nn.LayerNorm default


def _patch_merge_kernel(x_ref, we_ref, wo_ref, ge_ref, go_ref, be_ref, bo_ref,
                        o_ref):
    """Fused 2x2 merge + LayerNorm(4C) + Linear(4C->2C) on one token tile.

    x_ref  : (tile_h, 2, W/2, 2C)  both row-parity slabs (one contiguous DMA)
    w*_ref : (2C, 2C)              slab-partitioned reduction weight
    g*/b*  : (1, 2C)               slab-partitioned LayerNorm affine
    o_ref  : (tile_h, W/2, 2C)
    """
    th, _, w2, c2in = x_ref.shape
    rows = th * w2

    x = x_ref[...]                                   # single contiguous load
    xe = x[:, 0, :, :].reshape(rows, c2in).astype(jnp.float32)   # even rows
    xo = x[:, 1, :, :].reshape(rows, c2in).astype(jnp.float32)   # odd rows

    # One-pass LayerNorm statistics over the merged 4C channels (always f32).
    inv_n = 1.0 / (2.0 * c2in)                       # 1 / (4C)
    mean = (jnp.sum(xe, axis=-1, keepdims=True)
            + jnp.sum(xo, axis=-1, keepdims=True)) * inv_n
    ex2 = (jnp.sum(xe * xe, axis=-1, keepdims=True)
           + jnp.sum(xo * xo, axis=-1, keepdims=True)) * inv_n
    var = jnp.maximum(ex2 - mean * mean, 0.0)
    inv = jax.lax.rsqrt(var + LN_EPS)

    # Normalize + affine per slab; feed the MXU in the weight's dtype so bf16
    # weights use the native bf16 MXU path (f32 accumulation).
    mxu_dtype = we_ref.dtype
    ye = ((xe - mean) * inv * ge_ref[...].astype(jnp.float32)
          + be_ref[...].astype(jnp.float32)).astype(mxu_dtype)
    yo = ((xo - mean) * inv * go_ref[...].astype(jnp.float32)
          + bo_ref[...].astype(jnp.float32)).astype(mxu_dtype)

    acc = jnp.dot(ye, we_ref[...], preferred_element_type=jnp.float32)
    acc = acc + jnp.dot(yo, wo_ref[...], preferred_element_type=jnp.float32)
    o_ref[...] = acc.reshape(th, w2, -1).astype(o_ref.dtype)


def _vmem_capacity_bytes():
    """Per-core VMEM capacity; conservative 64 MiB (v7x) fallback."""
    try:
        return int(pltpu.get_tpu_info().vmem_capacity_bytes)
    except Exception:
        return 64 << 20


def _choose_tile_h(B, H2, W2, per_row_bytes, act_budget, target_rows):
    """Pick tile_h so tile_h*W2 merged tokens fit the activation VMEM budget.

    Prefers a divisor of H2 (exact tiling); accepts a ragged last tile rather
    than collapsing to tile_h=1 when H2 has no good divisor.
    """
    rows_budget = max(W2, min(target_rows,
                              act_budget // max(per_row_bytes, 1)))
    max_th = max(1, min(H2, rows_budget // max(W2, 1)))
    best_div = max(d for d in range(1, max_th + 1) if H2 % d == 0)
    tile_h = best_div if 2 * best_div >= max_th else max_th
    # Keep >= 2 grid steps so both v7x TensorCores / megacore halves get work.
    if B * ((H2 + tile_h - 1) // tile_h) < 2 and tile_h > 1:
        tile_h = (tile_h + 1) // 2
    return tile_h


def patch_merging_pallas(x, weight, gamma, beta, input_resolution,
                         target_rows=4096):
    """x: [B, H*W, C] -> [B, (H/2)*(W/2), 2C]

    weight: [4C, 2C]  (transposed PyTorch nn.Linear weight, torch channel
                       order cat([x0, x1, x2, x3])); bf16 weight selects the
                       bf16 MXU path.
    gamma, beta: [4C] LayerNorm affine params.
    """
    H, W = input_resolution
    B, L, C = x.shape
    assert L == H * W, "input feature has wrong size"
    assert H % 2 == 0 and W % 2 == 0, f"x size ({H}*{W}) are not even."
    H2, W2 = H // 2, W // 2
    C2in = 2 * C                       # channels per (even/odd row) slab
    C2out = 2 * C                      # reduction output channels

    # Free reshape (no data movement): [B, H*W, C] -> [B, H/2, 2, W/2, 2C].
    # For fixed (b, h2, hp, w2) the 2C lanes are [x_{hp,even w} | x_{hp,odd w}].
    xr = x.reshape(B, H2, 2, W2, C2in)

    # Statically regroup params to the slab layout:
    #   even-row slab channels = [x0 | x2]  -> torch rows [0:C]  ++ [2C:3C]
    #   odd-row  slab channels = [x1 | x3]  -> torch rows [C:2C] ++ [3C:4C]
    w_e = jnp.concatenate([weight[:C], weight[2 * C:3 * C]], axis=0)
    w_o = jnp.concatenate([weight[C:2 * C], weight[3 * C:]], axis=0)
    g_e = jnp.concatenate([gamma[:C], gamma[2 * C:3 * C]]).reshape(1, C2in)
    g_o = jnp.concatenate([gamma[C:2 * C], gamma[3 * C:]]).reshape(1, C2in)
    b_e = jnp.concatenate([beta[:C], beta[2 * C:3 * C]]).reshape(1, C2in)
    b_o = jnp.concatenate([beta[C:2 * C], beta[3 * C:]]).reshape(1, C2in)

    in_isz = jnp.dtype(x.dtype).itemsize
    w_isz = jnp.dtype(weight.dtype).itemsize
    vmem_cap = _vmem_capacity_bytes()

    # Bytes per merged token (double-buffered I/O tiles + in-kernel f32 temps).
    per_row = (2 * (2 * C2in) * in_isz          # input tile, 2 buffers
               + 2 * C2out * in_isz             # output tile, 2 buffers
               + 4 * (4 * C2in + 2 * C2out))    # peak f32 temporaries
    act_budget = (vmem_cap * 3) // 5            # ~60% of VMEM for activations
    tile_h = _choose_tile_h(B, H2, W2, per_row, act_budget, target_rows)
    n_h = pl.cdiv(H2, tile_h)
    grid = (B, n_h)

    # Explicit scoped-VMEM limit, capped generation-aware (~80% of physical).
    rows = tile_h * W2
    need = (rows * per_row
            + 2 * (2 * C2in * C2out * w_isz)    # w_e + w_o (default 2 buffers)
            + (4 << 20))                        # affine params + scratch margin
    vmem_limit = int(min(max(need, 32 << 20), (vmem_cap * 4) // 5))

    out = pl.pallas_call(
        _patch_merge_kernel,
        out_shape=jax.ShapeDtypeStruct((B, H2, W2, C2out), x.dtype),
        grid_spec=pltpu.PrefetchScalarGridSpec(
            num_scalar_prefetch=0,
            grid=grid,
            in_specs=[
                # Both row-parity slabs of this (batch, h2-tile): one
                # contiguous DMA per grid step.
                pl.BlockSpec((None, tile_h, 2, W2, C2in),
                             lambda b, h: (b, h, 0, 0, 0)),
                pl.BlockSpec((C2in, C2out), lambda b, h: (0, 0)),
                pl.BlockSpec((C2in, C2out), lambda b, h: (0, 0)),
                pl.BlockSpec((1, C2in), lambda b, h: (0, 0)),
                pl.BlockSpec((1, C2in), lambda b, h: (0, 0)),
                pl.BlockSpec((1, C2in), lambda b, h: (0, 0)),
                pl.BlockSpec((1, C2in), lambda b, h: (0, 0)),
            ],
            out_specs=pl.BlockSpec((None, tile_h, W2, C2out),
                                   lambda b, h: (b, h, 0, 0)),
        ),
        compiler_params=pltpu.CompilerParams(
            # On v7x, CORE_PARALLEL on the batch axis could shard across the
            # two TensorCores; kept as "parallel" here for portability.
            dimension_semantics=("parallel", "parallel"),
            vmem_limit_bytes=vmem_limit),
    )(xr, w_e, w_o, g_e, g_o, b_e, b_o)

    # Collapsing (H2, W2) -> H2*W2 is a free reshape (no extra HBM pass).
    return out.reshape(B, H2 * W2, C2out)


def patch_merging_ref(x, weight, gamma, beta, input_resolution):
    """Pure-JAX reference mirroring the PyTorch module."""
    H, W = input_resolution
    B, L, C = x.shape
    xr = x.reshape(B, H, W, C)
    x0 = xr[:, 0::2, 0::2, :]
    x1 = xr[:, 1::2, 0::2, :]
    x2 = xr[:, 0::2, 1::2, :]
    x3 = xr[:, 1::2, 1::2, :]
    xm = jnp.concatenate([x0, x1, x2, x3], axis=-1).reshape(B, -1, 4 * C)
    xm32 = xm.astype(jnp.float32)
    mean = jnp.mean(xm32, axis=-1, keepdims=True)
    var = jnp.mean((xm32 - mean) ** 2, axis=-1, keepdims=True)
    xn = (xm32 - mean) * jax.lax.rsqrt(var + LN_EPS)
    xn = xn * gamma.astype(jnp.float32) + beta.astype(jnp.float32)
    return jnp.dot(xn, weight.astype(jnp.float32)).astype(x.dtype)


if __name__ == "__main__":
    # Small, shape-consistent config: B=2, H=W=16, dim C=32 -> 4C=128, 2C=64.
    B, H, W, C = 2, 16, 16, 32
    key = jax.random.PRNGKey(0)
    kx, kw = jax.random.split(key)

    x = jax.random.normal(kx, (B, H * W, C), dtype=jnp.float32)
    # nn.Linear(4C, 2C, bias=False) weight is [2C, 4C] in torch; store transposed.
    weight = (jax.random.normal(kw, (4 * C, 2 * C), dtype=jnp.float32)
              * (1.0 / jnp.sqrt(4.0 * C)))
    gamma = jnp.ones((4 * C,), dtype=jnp.float32)   # LayerNorm default init
    beta = jnp.zeros((4 * C,), dtype=jnp.float32)

    fn = jax.jit(functools.partial(patch_merging_pallas,
                                   input_resolution=(H, W)))

    # --- f32 end-to-end: check against the pure-JAX reference ---
    out = jax.block_until_ready(fn(x, weight, gamma, beta))
    ref = patch_merging_ref(x, weight, gamma, beta, (H, W))
    assert out.shape == (B, (H // 2) * (W // 2), 2 * C), out.shape
    assert jnp.allclose(out, ref, atol=1e-3, rtol=1e-3), (
        float(jnp.max(jnp.abs(out - ref))))

    # --- bf16 activations + bf16 weight: exercises the bf16 MXU path ---
    xb = x.astype(jnp.bfloat16)
    wb = weight.astype(jnp.bfloat16)
    out_b = jax.block_until_ready(fn(xb, wb, gamma, beta))
    ref_b = patch_merging_ref(xb, wb, gamma, beta, (H, W))
    assert out_b.dtype == jnp.bfloat16
    diff = jnp.abs(out_b.astype(jnp.float32) - ref_b.astype(jnp.float32))
    assert jnp.allclose(out_b.astype(jnp.float32), ref_b.astype(jnp.float32),
                        atol=6e-2, rtol=6e-2), float(jnp.max(diff))

    print("KERNEL_OK")
</pallas_src>

<mosaic_0001>
module attributes {stable_mosaic.version = 11 : i64} {
  func.func @_patch_merge_kernel(%arg0: i32, %arg1: i32, %arg2: memref<1x8x2x8x64xf32, #tpu.memory_space<vmem>>, %arg3: memref<64x64xf32, #tpu.memory_space<vmem>>, %arg4: memref<64x64xf32, #tpu.memory_space<vmem>>, %arg5: memref<1x64xf32, #tpu.memory_space<vmem>>, %arg6: memref<1x64xf32, #tpu.memory_space<vmem>>, %arg7: memref<1x64xf32, #tpu.memory_space<vmem>>, %arg8: memref<1x64xf32, #tpu.memory_space<vmem>>, %arg9: memref<1x8x8x64xf32, #tpu.memory_space<vmem>>) attributes {dimension_semantics = [#tpu.dimension_semantics<parallel>, #tpu.dimension_semantics<parallel>], iteration_bounds = array<i64: 2, 1>, scalar_prefetch = 0 : i64, scratch_operands = 0 : i64, tpu.core_type = #tpu.core_type<tc>, window_params = [{transform_indices = @transform_0, window_bounds = array<i64: 1, 8, 2, 8, 64>}, {pipeline_mode = #tpu.pipeline_mode<synchronous>, transform_indices = @transform_1, window_bounds = array<i64: 64, 64>}, {pipeline_mode = #tpu.pipeline_mode<synchronous>, transform_indices = @transform_2, window_bounds = array<i64: 64, 64>}, {pipeline_mode = #tpu.pipeline_mode<synchronous>, transform_indices = @transform_3, window_bounds = array<i64: 1, 64>}, {pipeline_mode = #tpu.pipeline_mode<synchronous>, transform_indices = @transform_4, window_bounds = array<i64: 1, 64>}, {pipeline_mode = #tpu.pipeline_mode<synchronous>, transform_indices = @transform_5, window_bounds = array<i64: 1, 64>}, {pipeline_mode = #tpu.pipeline_mode<synchronous>, transform_indices = @transform_6, window_bounds = array<i64: 1, 64>}, {transform_indices = @transform_7, window_bounds = array<i64: 1, 8, 8, 64>}]} {
    %c0 = arith.constant 0 : index
    %c0_0 = arith.constant 0 : index
    %c0_1 = arith.constant 0 : index
    %c0_2 = arith.constant 0 : index
    %c0_3 = arith.constant 0 : index
    %0 = vector.load %arg2[%c0, %c0_0, %c0_1, %c0_2, %c0_3] : memref<1x8x2x8x64xf32, #tpu.memory_space<vmem>>, vector<1x8x2x8x64xf32>
    %1 = vector.shape_cast %0 : vector<1x8x2x8x64xf32> to vector<8x2x8x64xf32>
    %2 = vector.extract_strided_slice %1 {offsets = [0, 0, 0, 0], sizes = [8, 1, 8, 64], strides = [1, 1, 1, 1]} : vector<8x2x8x64xf32> to vector<8x1x8x64xf32>
    %3 = vector.shape_cast %2 : vector<8x1x8x64xf32> to vector<8x8x64xf32>
    %4 = vector.shape_cast %3 : vector<8x8x64xf32> to vector<64x64xf32>
    %5 = vector.extract_strided_slice %1 {offsets = [0, 1, 0, 0], sizes = [8, 1, 8, 64], strides = [1, 1, 1, 1]} : vector<8x2x8x64xf32> to vector<8x1x8x64xf32>
    %6 = vector.shape_cast %5 : vector<8x1x8x64xf32> to vector<8x8x64xf32>
    %7 = vector.shape_cast %6 : vector<8x8x64xf32> to vector<64x64xf32>
    %cst = arith.constant dense<0.000000e+00> : vector<64xf32>
    %8 = vector.multi_reduction <add>, %4, %cst [1] : vector<64x64xf32> to vector<64xf32>
    %9 = vector.shape_cast %8 : vector<64xf32> to vector<64x1xf32>
    %cst_4 = arith.constant dense<0.000000e+00> : vector<64xf32>
    %10 = vector.multi_reduction <add>, %7, %cst_4 [1] : vector<64x64xf32> to vector<64xf32>
    %11 = vector.shape_cast %10 : vector<64xf32> to vector<64x1xf32>
    %12 = arith.addf %9, %11 : vector<64x1xf32>
    %cst_5 = arith.constant 7.812500e-03 : f32
    %13 = vector.broadcast %cst_5 : f32 to vector<64x1xf32>
    %14 = arith.mulf %12, %13 : vector<64x1xf32>
    %15 = arith.mulf %4, %4 : vector<64x64xf32>
    %cst_6 = arith.constant dense<0.000000e+00> : vector<64xf32>
    %16 = vector.multi_reduction <add>, %15, %cst_6 [1] : vector<64x64xf32> to vector<64xf32>
    %17 = vector.shape_cast %16 : vector<64xf32> to vector<64x1xf32>
    %18 = arith.mulf %7, %7 : vector<64x64xf32>
    %cst_7 = arith.constant dense<0.000000e+00> : vector<64xf32>
    %19 = vector.multi_reduction <add>, %18, %cst_7 [1] : vector<64x64xf32> to vector<64xf32>
    %20 = vector.shape_cast %19 : vector<64xf32> to vector<64x1xf32>
    %21 = arith.addf %17, %20 : vector<64x1xf32>
    %cst_8 = arith.constant 7.812500e-03 : f32
    %22 = vector.broadcast %cst_8 : f32 to vector<64x1xf32>
    %23 = arith.mulf %21, %22 : vector<64x1xf32>
    %24 = arith.mulf %14, %14 : vector<64x1xf32>
    %25 = arith.subf %23, %24 : vector<64x1xf32>
    %cst_9 = arith.constant 0.000000e+00 : f32
    %26 = vector.broadcast %cst_9 : f32 to vector<64x1xf32>
    %27 = arith.maximumf %25, %26 : vector<64x1xf32>
    %cst_10 = arith.constant 9.99999974E-6 : f32
    %28 = vector.broadcast %cst_10 : f32 to vector<64x1xf32>
    %29 = arith.addf %27, %28 : vector<64x1xf32>
    %30 = math.rsqrt %29 : vector<64x1xf32>
    %31 = vector.broadcast %14 : vector<64x1xf32> to vector<64x64xf32>
    %32 = arith.subf %4, %31 : vector<64x64xf32>
    %33 = vector.broadcast %30 : vector<64x1xf32> to vector<64x64xf32>
    %34 = arith.mulf %32, %33 : vector<64x64xf32>
    %c0_11 = arith.constant 0 : index
    %c0_12 = arith.constant 0 : index
    %35 = vector.load %arg5[%c0_11, %c0_12] : memref<1x64xf32, #tpu.memory_space<vmem>>, vector<1x64xf32>
    %36 = vector.broadcast %35 : vector<1x64xf32> to vector<64x64xf32>
    %37 = arith.mulf %34, %36 : vector<64x64xf32>
    %c0_13 = arith.constant 0 : index
    %c0_14 = arith.constant 0 : index
    %38 = vector.load %arg7[%c0_13, %c0_14] : memref<1x64xf32, #tpu.memory_space<vmem>>, vector<1x64xf32>
    %39 = vector.broadcast %38 : vector<1x64xf32> to vector<64x64xf32>
    %40 = arith.addf %37, %39 : vector<64x64xf32>
    %41 = vector.broadcast %14 : vector<64x1xf32> to vector<64x64xf32>
    %42 = arith.subf %7, %41 : vector<64x64xf32>
    %43 = vector.broadcast %30 : vector<64x1xf32> to vector<64x64xf32>
    %44 = arith.mulf %42, %43 : vector<64x64xf32>
    %c0_15 = arith.constant 0 : index
    %c0_16 = arith.constant 0 : index
    %45 = vector.load %arg6[%c0_15, %c0_16] : memref<1x64xf32, #tpu.memory_space<vmem>>, vector<1x64xf32>
    %46 = vector.broadcast %45 : vector<1x64xf32> to vector<64x64xf32>
    %47 = arith.mulf %44, %46 : vector<64x64xf32>
    %c0_17 = arith.constant 0 : index
    %c0_18 = arith.constant 0 : index
    %48 = vector.load %arg8[%c0_17, %c0_18] : memref<1x64xf32, #tpu.memory_space<vmem>>, vector<1x64xf32>
    %49 = vector.broadcast %48 : vector<1x64xf32> to vector<64x64xf32>
    %50 = arith.addf %47, %49 : vector<64x64xf32>
    %c0_19 = arith.constant 0 : index
    %c0_20 = arith.constant 0 : index
    %51 = vector.load %arg3[%c0_19, %c0_20] : memref<64x64xf32, #tpu.memory_space<vmem>>, vector<64x64xf32>
    %cst_21 = arith.constant dense<0.000000e+00> : vector<64x64xf32>
    %52 = tpu.matmul %40, %51, %cst_21 {dimension_numbers = #tpu.dot_dimension_numbers<[1], [0], [0], [1], [0, 0, 1, 1], [], []>} : vector<64x64xf32>, vector<64x64xf32>, vector<64x64xf32> -> vector<64x64xf32>
    %c0_22 = arith.constant 0 : index
    %c0_23 = arith.constant 0 : index
    %53 = vector.load %arg4[%c0_22, %c0_23] : memref<64x64xf32, #tpu.memory_space<vmem>>, vector<64x64xf32>
    %cst_24 = arith.constant dense<0.000000e+00> : vector<64x64xf32>
    %54 = tpu.matmul %50, %53, %cst_24 {dimension_numbers = #tpu.dot_dimension_numbers<[1], [0], [0], [1], [0, 0, 1, 1], [], []>} : vector<64x64xf32>, vector<64x64xf32>, vector<64x64xf32> -> vector<64x64xf32>
    %55 = arith.addf %52, %54 : vector<64x64xf32>
    %56 = vector.shape_cast %55 : vector<64x64xf32> to vector<8x8x64xf32>
    %c0_25 = arith.constant 0 : index
    %c0_26 = arith.constant 0 : index
    %c0_27 = arith.constant 0 : index
    %c0_28 = arith.constant 0 : index
    %57 = vector.load %arg9[%c0_25, %c0_26, %c0_27, %c0_28] : memref<1x8x8x64xf32, #tpu.memory_space<vmem>>, vector<1x8x8x64xf32>
    %58 = vector.shape_cast %57 : vector<1x8x8x64xf32> to vector<8x8x64xf32>
    %59 = vector.shape_cast %56 : vector<8x8x64xf32> to vector<1x8x8x64xf32>
    tpu.vector_store %arg9[%c0_25, %c0_26, %c0_27, %c0_28], %59 {strides = array<i32>} : memref<1x8x8x64xf32, #tpu.memory_space<vmem>>, vector<1x8x8x64xf32>,
    return
  }
  func.func @transform_0(%arg0: i32, %arg1: i32) -> (i32, i32, i32, i32, i32) {
    %c0_i32 = arith.constant 0 : i32
    %c0_i32_0 = arith.constant 0 : i32
    %c0_i32_1 = arith.constant 0 : i32
    %c0_i32_2 = arith.constant 0 : i32
    return %arg0, %arg1, %c0_i32, %c0_i32_0, %c0_i32_1 : i32, i32, i32, i32, i32
  }
  func.func @transform_1(%arg0: i32, %arg1: i32) -> (i32, i32) {
    %c0_i32 = arith.constant 0 : i32
    %c0_i32_0 = arith.constant 0 : i32
    %c0_i32_1 = arith.constant 0 : i32
    return %c0_i32, %c0_i32_0 : i32, i32
  }
  func.func @transform_2(%arg0: i32, %arg1: i32) -> (i32, i32) {
    %c0_i32 = arith.constant 0 : i32
    %c0_i32_0 = arith.constant 0 : i32
    %c0_i32_1 = arith.constant 0 : i32
    return %c0_i32, %c0_i32_0 : i32, i32
  }
  func.func @transform_3(%arg0: i32, %arg1: i32) -> (i32, i32) {
    %c0_i32 = arith.constant 0 : i32
    %c0_i32_0 = arith.constant 0 : i32
    %c0_i32_1 = arith.constant 0 : i32
    return %c0_i32, %c0_i32_0 : i32, i32
  }
  func.func @transform_4(%arg0: i32, %arg1: i32) -> (i32, i32) {
    %c0_i32 = arith.constant 0 : i32
    %c0_i32_0 = arith.constant 0 : i32
    %c0_i32_1 = arith.constant 0 : i32
    return %c0_i32, %c0_i32_0 : i32, i32
  }
  func.func @transform_5(%arg0: i32, %arg1: i32) -> (i32, i32) {
    %c0_i32 = arith.constant 0 : i32
    %c0_i32_0 = arith.constant 0 : i32
    %c0_i32_1 = arith.constant 0 : i32
    return %c0_i32, %c0_i32_0 : i32, i32
  }
  func.func @transform_6(%arg0: i32, %arg1: i32) -> (i32, i32) {
    %c0_i32 = arith.constant 0 : i32
    %c0_i32_0 = arith.constant 0 : i32
    %c0_i32_1 = arith.constant 0 : i32
    return %c0_i32, %c0_i32_0 : i32, i32
  }
  func.func @transform_7(%arg0: i32, %arg1: i32) -> (i32, i32, i32, i32) {
    %c0_i32 = arith.constant 0 : i32
    %c0_i32_0 = arith.constant 0 : i32
    %c0_i32_1 = arith.constant 0 : i32
    return %arg0, %arg1, %c0_i32, %c0_i32_0 : i32, i32, i32, i32
  }
}

</mosaic_0001>

<llo_original>
// kernel: patch_merging_pallas.1
$region0: #{patch_merging_pallas.1}
  #allocation0 [shape = 'u32[]', space=smem, size = 0x4, offset = 0x4, fixed_abs, tag = 'smem constant byte address 0x4 - core index']
  #allocation1 [shape = 'u32[144,128]{1,0:T(1,128)}', space=vmem, size = 0x12000, scoped, tag = 'internal scratch']
  %s0 = inlined_call_operand.vmem [shape: f32[2,8,2,8,64], index: 0, kind: input, shape index: {}]
  %s1 = inlined_call_operand.vmem [shape: f32[64,64], index: 1, kind: input, shape index: {}]
  %s2 = inlined_call_operand.vmem [shape: f32[64,64], index: 2, kind: input, shape index: {}]
  %s3 = inlined_call_operand.vmem [shape: f32[1,64], index: 3, kind: input, shape index: {}]
  %s4 = inlined_call_operand.vmem [shape: f32[1,64], index: 4, kind: input, shape index: {}]
  %s5 = inlined_call_operand.vmem [shape: f32[1,64], index: 5, kind: input, shape index: {}]
  %s6 = inlined_call_operand.vmem [shape: f32[1,64], index: 6, kind: input, shape index: {}]
  %s7 = inlined_call_operand.hbm [shape: f32[2,8,8,64], index: 7, kind: output, shape index: {}]
  %s8 = sld [smem:[#allocation0]]
  $region61: #{patch_merging_pallas.1} parent=0
    _
  %s10 = ssub.s32 1, %s8
  %s11 = scalar_select 0, %s10, %s8
  $region1: #{patch_merging_pallas.1} parent=0
    #allocation2 [shape = 'u8[65536]{0}', space=vmem, size = 0x10000, scoped, tag = 'output window, operand 0']
    #allocation3 [shape = 's32[2]{0}', space=sflag, size = 0x8, scoped, tag = 'scoped memory for patch_merging_pallas.1']
    %12 = vsyncpa [#allocation3], 0
    %s13 = scalar_lea.sflag [#allocation3], 1
    %14 = vsyncpa %s13, 0
    loop: start=0, step=1, limit=4
    $region2: #{patch_merging_pallas.1} parent=1 // loop_pre_header
      _
    $region3: #{patch_merging_pallas.1} parent=1 // loop_header
      %s16 = sphi 0, %s20
      %p17 = scmp.ge.s32.totalorder %s16, 4
      %s23 = sphi 0, %s35
      %s24 = sphi 0, %s31
      %s25 = sphi 0, %s23
      %s26 = sphi 0, %s24
      %s27 = sphi 0, %s25
      %s28 = sphi 0, %s26
      %s40 = sphi 0, %s42
      %s43 = sphi 0, %s40
      %s44 = sphi 0, %s43
      %s60 = sphi 0, %s44
      %s64 = sphi 0, %s64
      %s66 = sphi 0, %s64
      %s67 = sphi 0, %s66
      %s81 = sphi 0, %s67
      %s85 = sphi 0, %s85
      %s87 = sphi 0, %s85
      %s88 = sphi 0, %s87
      %s102 = sphi 0, %s88
      %s106 = sphi 0, %s106
      %s108 = sphi 0, %s106
      %s109 = sphi 0, %s108
      %s123 = sphi 0, %s109
      %s127 = sphi 0, %s127
      %s129 = sphi 0, %s127
      %s130 = sphi 0, %s129
      %s144 = sphi 0, %s130
      %s148 = sphi 0, %s148
      %s150 = sphi 0, %s148
      %s151 = sphi 0, %s150
      %s165 = sphi 0, %s151
      %s169 = sphi 0, %s169
      %s171 = sphi 0, %s169
      %s172 = sphi 0, %s171
      %s186 = sphi 0, %s172
      %s194 = sphi 0, %s196
      %s197 = sphi 0, %s194
      %s198 = sphi 0, %s197
      %s214 = sphi 0, %s198
    $region4: #{patch_merging_pallas.1} parent=1 // loop_header_branch
      %19 = sbr.rel (%p17) target = $region8
    $region5: #{patch_merging_pallas.1} parent=1 // loop_body
      %s21 = ssub.s32 %s16, 1
      %s22 = ssub.s32 %s16, 2
      %s29 = sadd.s32 1, %s24
      %p30 = scmp.ge.s32.totalorder %s29, 1
      %s31 = scalar_select %p30, 0, %s29
      %s32 = sadd.s32 1, %s23
      %s33 = scalar_select %p30, %s32, %s23
      %p34 = scmp.ge.s32.totalorder %s33, 2
      %s35 = scalar_select %p34, 0, %s33
      %s36 = ssub.s32 %s23, %s35
      %s37 = ssub.s32 %s24, %s31
      %s38 = sor.u32 %s36, %s37
      %p39 = scmp.eq.s32.totalorder %s38, 0
      %s41 = sadd.s32 %s40, 1
      %s42 = scalar_select %p39, %s40, %s41
      %p45 = pneg %p39
      %p46 = scmp.eq.s32.totalorder %s16, 1
      %p47 = por %p45, %p46
      %p48 = scmp.ne.s32.totalorder %s40, %s43
      %p49 = scmp.eq.s32.totalorder %s16, 0
      %p50 = por %p48, %p49
      %p51 = scmp.ne.s32.totalorder %s40, %s43
      %p52 = scmp.eq.s32.totalorder %s21, 1
      %p53 = por %p51, %p52
      %p54 = scmp.ne.s32.totalorder %s43, %s44
      %p55 = scmp.eq.s32.totalorder %s21, 0
      %p56 = por %p54, %p55
      %p57 = scmp.ne.s32.totalorder %s43, %s44
      %p58 = scmp.eq.s32.totalorder %s22, 1
      %p59 = por %p57, %p58
      %p61 = scmp.ne.s32.totalorder %s44, %s60
      %p62 = scmp.eq.s32.totalorder %s22, 0
      %p63 = por %p61, %p62
      %s65 = sadd.s32 %s64, 1
      %p68 = scmp.eq.s32.totalorder %s16, 1
      %p69 = scmp.ne.s32.totalorder %s64, %s66
      %p70 = scmp.eq.s32.totalorder %s16, 0
      %p71 = por %p69, %p70
      %p72 = scmp.ne.s32.totalorder %s64, %s66
      %p73 = scmp.eq.s32.totalorder %s21, 1
      %p74 = por %p72, %p73
      %p75 = scmp.ne.s32.totalorder %s66, %s67
      %p76 = scmp.eq.s32.totalorder %s21, 0
      %p77 = por %p75, %p76
      %p78 = scmp.ne.s32.totalorder %s66, %s67
      %p79 = scmp.eq.s32.totalorder %s22, 1
      %p80 = por %p78, %p79
      %p82 = scmp.ne.s32.totalorder %s67, %s81
      %p83 = scmp.eq.s32.totalorder %s22, 0
      %p84 = por %p82, %p83
      %s86 = sadd.s32 %s85, 1
      %p89 = scmp.eq.s32.totalorder %s16, 1
      %p90 = scmp.ne.s32.totalorder %s85, %s87
      %p91 = scmp.eq.s32.totalorder %s16, 0
      %p92 = por %p90, %p91
      %p93 = scmp.ne.s32.totalorder %s85, %s87
      %p94 = scmp.eq.s32.totalorder %s21, 1
      %p95 = por %p93, %p94
      %p96 = scmp.ne.s32.totalorder %s87, %s88
      %p97 = scmp.eq.s32.totalorder %s21, 0
      %p98 = por %p96, %p97
      %p99 = scmp.ne.s32.totalorder %s87, %s88
      %p100 = scmp.eq.s32.totalorder %s22, 1
      %p101 = por %p99, %p100
      %p103 = scmp.ne.s32.totalorder %s88, %s102
      %p104 = scmp.eq.s32.totalorder %s22, 0
      %p105 = por %p103, %p104
      %s107 = sadd.s32 %s106, 1
      %p110 = scmp.eq.s32.totalorder %s16, 1
      %p111 = scmp.ne.s32.totalorder %s106, %s108
      %p112 = scmp.eq.s32.totalorder %s16, 0
      %p113 = por %p111, %p112
      %p114 = scmp.ne.s32.totalorder %s106, %s108
      %p115 = scmp.eq.s32.totalorder %s21, 1
      %p116 = por %p114, %p115
      %p117 = scmp.ne.s32.totalorder %s108, %s109
      %p118 = scmp.eq.s32.totalorder %s21, 0
      %p119 = por %p117, %p118
      %p120 = scmp.ne.s32.totalorder %s108, %s109
      %p121 = scmp.eq.s32.totalorder %s22, 1
      %p122 = por %p120, %p121
      %p124 = scmp.ne.s32.totalorder %s109, %s123
      %p125 = scmp.eq.s32.totalorder %s22, 0
      %p126 = por %p124, %p125
      %s128 = sadd.s32 %s127, 1
      %p131 = scmp.eq.s32.totalorder %s16, 1
      %p132 = scmp.ne.s32.totalorder %s127, %s129
      %p133 = scmp.eq.s32.totalorder %s16, 0
      %p134 = por %p132, %p133
      %p135 = scmp.ne.s32.totalorder %s127, %s129
      %p136 = scmp.eq.s32.totalorder %s21, 1
      %p137 = por %p135, %p136
      %p138 = scmp.ne.s32.totalorder %s129, %s130
      %p139 = scmp.eq.s32.totalorder %s21, 0
      %p140 = por %p138, %p139
      %p141 = scmp.ne.s32.totalorder %s129, %s130
      %p142 = scmp.eq.s32.totalorder %s22, 1
      %p143 = por %p141, %p142
      %p145 = scmp.ne.s32.totalorder %s130, %s144
      %p146 = scmp.eq.s32.totalorder %s22, 0
      %p147 = por %p145, %p146
      %s149 = sadd.s32 %s148, 1
      %p152 = scmp.eq.s32.totalorder %s16, 1
      %p153 = scmp.ne.s32.totalorder %s148, %s150
      %p154 = scmp.eq.s32.totalorder %s16, 0
      %p155 = por %p153, %p154
      %p156 = scmp.ne.s32.totalorder %s148, %s150
      %p157 = scmp.eq.s32.totalorder %s21, 1
      %p158 = por %p156, %p157
      %p159 = scmp.ne.s32.totalorder %s150, %s151
      %p160 = scmp.eq.s32.totalorder %s21, 0
      %p161 = por %p159, %p160
      %p162 = scmp.ne.s32.totalorder %s150, %s151
      %p163 = scmp.eq.s32.totalorder %s22, 1
      %p164 = por %p162, %p163
      %p166 = scmp.ne.s32.totalorder %s151, %s165
      %p167 = scmp.eq.s32.totalorder %s22, 0
      %p168 = por %p166, %p167
      %s170 = sadd.s32 %s169, 1
      %p173 = scmp.eq.s32.totalorder %s16, 1
      %p174 = scmp.ne.s32.totalorder %s169, %s171
      %p175 = scmp.eq.s32.totalorder %s16, 0
      %p176 = por %p174, %p175
      %p177 = scmp.ne.s32.totalorder %s169, %s171
      %p178 = scmp.eq.s32.totalorder %s21, 1
      %p179 = por %p177, %p178
      %p180 = scmp.ne.s32.totalorder %s171, %s172
      %p181 = scmp.eq.s32.totalorder %s21, 0
      %p182 = por %p180, %p181
      %p183 = scmp.ne.s32.totalorder %s171, %s172
      %p184 = scmp.eq.s32.totalorder %s22, 1
      %p185 = por %p183, %p184
      %p187 = scmp.ne.s32.totalorder %s172, %s186
      %p188 = scmp.eq.s32.totalorder %s22, 0
      %p189 = por %p187, %p188
      %s190 = ssub.s32 %s23, %s35
      %s191 = ssub.s32 %s24, %s31
      %s192 = sor.u32 %s190, %s191
      %p193 = scmp.eq.s32.totalorder %s192, 0
      %s195 = sadd.s32 %s194, 1
      %s196 = scalar_select %p193, %s194, %s195
      %p199 = pneg %p193
      %p200 = scmp.eq.s32.totalorder %s16, 1
      %p201 = por %p199, %p200
      %p202 = scmp.ne.s32.totalorder %s194, %s197
      %p203 = scmp.eq.s32.totalorder %s16, 0
      %p204 = por %p202, %p203
      %p205 = scmp.ne.s32.totalorder %s194, %s197
      %p206 = scmp.eq.s32.totalorder %s21, 1
      %p207 = por %p205, %p206
      %p208 = scmp.ne.s32.totalorder %s197, %s198
      %p209 = scmp.eq.s32.totalorder %s21, 0
      %p210 = por %p208, %p209
      %p211 = scmp.ne.s32.totalorder %s197, %s198
      %p212 = scmp.eq.s32.totalorder %s22, 1
      %p213 = por %p211, %p212
      %p215 = scmp.ne.s32.totalorder %s198, %s214
      %p216 = scmp.eq.s32.totalorder %s22, 0
      %p217 = por %p215, %p216
      %p218 = scmp.le.s32.totalorder 1, %s16
      %p219 = scmp.lt.s32.totalorder %s16, 3
      %p220 = pnand %p218, %p219
      %p221 = pneg %p220
      // Predicated region
      $region9: #{patch_merging_pallas.1} parent=5 // pred_check
        _
      $region10: #{patch_merging_pallas.1} parent=5 // pred_check_branch
        %223 = sbr.rel (%p220) target = $region12
      $region11: #{patch_merging_pallas.1} parent=5 // pred_region
        %s224 = ssub.s32 %s16, 1
        // Predicated region
        $region13: #{patch_merging_pallas.1} parent=11 // pred_check
          %p225 = pneg %p77
        $region14: #{patch_merging_pallas.1} parent=11 // pred_check_branch
          %227 = sbr.rel (%p225) target = $region16
        $region15: #{patch_merging_pallas.1} parent=11 // pred_region
          _
        $region16: #{patch_merging_pallas.1} parent=11 // pred_fallthru
          _
        // Predicated region
        $region17: #{patch_merging_pallas.1} parent=11 // pred_check
          %p228 = pneg %p98
        $region18: #{patch_merging_pallas.1} parent=11 // pred_check_branch
          %230 = sbr.rel (%p228) target = $region20
        $region19: #{patch_merging_pallas.1} parent=11 // pred_region
          _
        $region20: #{patch_merging_pallas.1} parent=11 // pred_fallthru
          _
        // Predicated region
        $region21: #{patch_merging_pallas.1} parent=11 // pred_check
          %p231 = pneg %p119
        $region22: #{patch_merging_pallas.1} parent=11 // pred_check_branch
          %233 = sbr.rel (%p231) target = $region24
        $region23: #{patch_merging_pallas.1} parent=11 // pred_region
          _
        $region24: #{patch_merging_pallas.1} parent=11 // pred_fallthru
          _
        // Predicated region
        $region25: #{patch_merging_pallas.1} parent=11 // pred_check
          %p234 = pneg %p140
        $region26: #{patch_merging_pallas.1} parent=11 // pred_check_branch
          %236 = sbr.rel (%p234) target = $region28
        $region27: #{patch_merging_pallas.1} parent=11 // pred_region
          _
        $region28: #{patch_merging_pallas.1} parent=11 // pred_fallthru
          _
        // Predicated region
        $region29: #{patch_merging_pallas.1} parent=11 // pred_check
          %p237 = pneg %p161
        $region30: #{patch_merging_pallas.1} parent=11 // pred_check_branch
          %239 = sbr.rel (%p237) target = $region32
        $region31: #{patch_merging_pallas.1} parent=11 // pred_region
          _
        $region32: #{patch_merging_pallas.1} parent=11 // pred_fallthru
          _
        // Predicated region
        $region33: #{patch_merging_pallas.1} parent=11 // pred_check
          %p240 = pneg %p182
        $region34: #{patch_merging_pallas.1} parent=11 // pred_check_branch
          %242 = sbr.rel (%p240) target = $region36
        $region35: #{patch_merging_pallas.1} parent=11 // pred_region
          _
        $region36: #{patch_merging_pallas.1} parent=11 // pred_fallthru
          _
      $region12: #{patch_merging_pallas.1} parent=5 // pred_fallthru
        _
      %p243 = scmp.lt.s32.totalorder %s16, 2
      // Predicated region
      $region37: #{patch_merging_pallas.1} parent=5 // pred_check
        %p244 = pneg %p243
      $region38: #{patch_merging_pallas.1} parent=5 // pred_check_branch
        %246 = sbr.rel (%p244) target = $region40
      $region39: #{patch_merging_pallas.1} parent=5 // pred_region
        // Predicated region
        $region41: #{patch_merging_pallas.1} parent=39 // pred_check
          %p247 = pneg %p50
        $region42: #{patch_merging_pallas.1} parent=39 // pred_check_branch
          %249 = sbr.rel (%p247) target = $region44
        $region43: #{patch_merging_pallas.1} parent=39 // pred_region
          %s250 = smul.u32 8, %s24
          %p251 = scmp.lt.s32.totalorder %s23, 1
          %s252 = scalar_select %p251, %s23, 1
          %p253 = scmp.lt.s32.totalorder %s250, 7
          %s254 = scalar_select %p253, %s250, 7
          %s255 = smul.addr %s254, 2
          %s256 = smul.addr %s252, 16
          %s257 = sadd.s32 %s255, %s256
          %s258 = smul.addr %s257, 8
          %s259 = scalar_lea.vmem %s0, %s258
          %s260 = smul.u32 8, %s24
        $region44: #{patch_merging_pallas.1} parent=39 // pred_fallthru
          _
      $region40: #{patch_merging_pallas.1} parent=5 // pred_fallthru
        _
      %p261 = scmp.le.s32.totalorder 1, %s16
      %p262 = scmp.lt.s32.totalorder %s16, 3
      %p263 = pnand %p261, %p262
      %p264 = pneg %p263
      // Predicated region
      $region45: #{patch_merging_pallas.1} parent=5 // pred_check
        _
      $region46: #{patch_merging_pallas.1} parent=5 // pred_check_branch
        %266 = sbr.rel (%p263) target = $region48
      $region47: #{patch_merging_pallas.1} parent=5 // pred_region
        %s267 = ssub.s32 %s16, 1
        %s268 = smul.u32 8, %s26
        %p269 = scmp.lt.s32.totalorder %s25, 1
        %s270 = scalar_select %p269, %s25, 1
        %p271 = scmp.lt.s32.totalorder %s268, 7
        %s272 = scalar_select %p271, %s268, 7
        %s273 = smul.addr %s272, 2
        %s274 = smul.addr %s270, 16
        %s275 = sadd.s32 %s273, %s274
        %s276 = smul.addr %s275, 8
        %s277 = scalar_lea.vmem %s0, %s276
        %p278 = pneg %p56
        %p279 = pneg %p53
        %p280 = pneg %p77
        %p281 = pneg %p74
        %p282 = pneg %p98
        %p283 = pneg %p95
        %p284 = pneg %p119
        %p285 = pneg %p116
        %p286 = pneg %p140
        %p287 = pneg %p137
        %p288 = pneg %p161
        %p289 = pneg %p158
        %p290 = pneg %p182
        %p291 = pneg %p179
        %p292 = pneg %p210
        %p293 = pneg %p207
        %s294 = sand.u32 %s197, 1
        %s295 = scalar_lea.sflag [#allocation3], %s294
        %s296 = sand.u32 %s197, 1
        %s297 = smul.addr %s296, 64
        %s298 = scalar_lea.vmem [#allocation2], %s297
        %s299 = smul.u32 8, %s26
        %p300 = scmp.lt.s32.totalorder %s25, 1
        %s301 = scalar_select %p300, %s25, 1
        %p302 = scmp.lt.s32.totalorder %s299, 7
        %s303 = scalar_select %p302, %s299, 7
        %s304 = smul.addr %s303, 2
        %s305 = smul.addr %s301, 16
        %s306 = sadd.s32 %s304, %s305
        %s307 = smul.addr %s306, 8
        %s308 = scalar_lea.vmem %s0, %s307
        %s309 = smul.u32 8, %s26
        %s310 = smul.u32 8, %s26
        %v311 = vld [vmem:[%s308] sm:$0xff]
        %v312 = vld [vmem:[%s308 + $0x8] sm:$0xff]
        %v313 = vld [vmem:[%s308 + $0x10] sm:$0xff]
        %v314 = vld [vmem:[%s308 + $0x18] sm:$0xff]
        %v315 = vld [vmem:[%s308 + $0x20] sm:$0xff]
        %v316 = vld [vmem:[%s308 + $0x28] sm:$0xff]
        %v317 = vld [vmem:[%s308 + $0x30] sm:$0xff]
        %v318 = vld [vmem:[%s308 + $0x38] sm:$0xff]
        %v319 = vld [vmem:[%s308 + $0x40] sm:$0xff]
        %v320 = vld [vmem:[%s308 + $0x48] sm:$0xff]
        %v321 = vld [vmem:[%s308 + $0x50] sm:$0xff]
        %v322 = vld [vmem:[%s308 + $0x58] sm:$0xff]
        %v323 = vld [vmem:[%s308 + $0x60] sm:$0xff]
        %v324 = vld [vmem:[%s308 + $0x68] sm:$0xff]
        %v325 = vld [vmem:[%s308 + $0x70] sm:$0xff]
        %v326 = vld [vmem:[%s308 + $0x78] sm:$0xff]
        %vm327 = vcmask 523264
        %v328 = vsel %vm327, %v311, 0.0
        %329 = vadd.xlane.f32.xlu0 %v328
        %v330 = vpop.xlane.xlu0 %329
        %v331 = vsel %vm327, %v313, 0.0
        %332 = vadd.xlane.f32.xlu0 %v331
        %v333 = vpop.xlane.xlu0 %332
        %v334 = vsel %vm327, %v315, 0.0
        %335 = vadd.xlane.f32.xlu0 %v334
        %v336 = vpop.xlane.xlu0 %335
        %v337 = vsel %vm327, %v317, 0.0
        %338 = vadd.xlane.f32.xlu0 %v337
        %v339 = vpop.xlane.xlu0 %338
        %v340 = vsel %vm327, %v319, 0.0
        %341 = vadd.xlane.f32.xlu0 %v340
        %v342 = vpop.xlane.xlu0 %341
        %v343 = vsel %vm327, %v321, 0.0
        %344 = vadd.xlane.f32.xlu0 %v343
        %v345 = vpop.xlane.xlu0 %344
        %v346 = vsel %vm327, %v323, 0.0
        %347 = vadd.xlane.f32.xlu0 %v346
        %v348 = vpop.xlane.xlu0 %347
        %v349 = vsel %vm327, %v325, 0.0
        %350 = vadd.xlane.f32.xlu0 %v349
        %v351 = vpop.xlane.xlu0 %350
        %v352 = vsel %vm327, %v312, 0.0
        %353 = vadd.xlane.f32.xlu0 %v352
        %v354 = vpop.xlane.xlu0 %353
        %v355 = vsel %vm327, %v314, 0.0
        %356 = vadd.xlane.f32.xlu0 %v355
        %v357 = vpop.xlane.xlu0 %356
        %v358 = vsel %vm327, %v316, 0.0
        %359 = vadd.xlane.f32.xlu0 %v358
        %v360 = vpop.xlane.xlu0 %359
        %v361 = vsel %vm327, %v318, 0.0
        %362 = vadd.xlane.f32.xlu0 %v361
        %v363 = vpop.xlane.xlu0 %362
        %v364 = vsel %vm327, %v320, 0.0
        %365 = vadd.xlane.f32.xlu0 %v364
        %v366 = vpop.xlane.xlu0 %365
        %v367 = vsel %vm327, %v322, 0.0
        %368 = vadd.xlane.f32.xlu0 %v367
        %v369 = vpop.xlane.xlu0 %368
        %v370 = vsel %vm327, %v324, 0.0
        %371 = vadd.xlane.f32.xlu0 %v370
        %v372 = vpop.xlane.xlu0 %371
        %v373 = vsel %vm327, %v326, 0.0
        %374 = vadd.xlane.f32.xlu0 %v373
        %v375 = vpop.xlane.xlu0 %374
        %v376 = vadd.f32 %v330, %v354
        %v377 = vadd.f32 %v333, %v357
        %v378 = vadd.f32 %v336, %v360
        %v379 = vadd.f32 %v339, %v363
        %v380 = vadd.f32 %v342, %v366
        %v381 = vadd.f32 %v345, %v369
        %v382 = vadd.f32 %v348, %v372
        %v383 = vadd.f32 %v351, %v375
        %v384 = vmul.f32 %v376, 0.0078125
        %v385 = vmul.f32 %v377, 0.0078125
        %v386 = vmul.f32 %v378, 0.0078125
        %v387 = vmul.f32 %v379, 0.0078125
        %v388 = vmul.f32 %v380, 0.0078125
        %v389 = vmul.f32 %v381, 0.0078125
        %v390 = vmul.f32 %v382, 0.0078125
        %v391 = vmul.f32 %v383, 0.0078125
        %v392 = vmul.f32 %v311, %v311
        %v393 = vmul.f32 %v313, %v313
        %v394 = vmul.f32 %v315, %v315
        %v395 = vmul.f32 %v317, %v317
        %v396 = vmul.f32 %v319, %v319
        %v397 = vmul.f32 %v321, %v321
        %v398 = vmul.f32 %v323, %v323
        %v399 = vmul.f32 %v325, %v325
        %v400 = vsel %vm327, %v392, 0.0
        %401 = vadd.xlane.f32.xlu0 %v400
        %v402 = vpop.xlane.xlu0 %401
        %v403 = vsel %vm327, %v393, 0.0
        %404 = vadd.xlane.f32.xlu0 %v403
        %v405 = vpop.xlane.xlu0 %404
        %v406 = vsel %vm327, %v394, 0.0
        %407 = vadd.xlane.f32.xlu0 %v406
        %v408 = vpop.xlane.xlu0 %407
        %v409 = vsel %vm327, %v395, 0.0
        %410 = vadd.xlane.f32.xlu0 %v409
        %v411 = vpop.xlane.xlu0 %410
        %v412 = vsel %vm327, %v396, 0.0
        %413 = vadd.xlane.f32.xlu0 %v412
        %v414 = vpop.xlane.xlu0 %413
        %v415 = vsel %vm327, %v397, 0.0
        %416 = vadd.xlane.f32.xlu0 %v415
        %v417 = vpop.xlane.xlu0 %416
        %v418 = vsel %vm327, %v398, 0.0
        %419 = vadd.xlane.f32.xlu0 %v418
        %v420 = vpop.xlane.xlu0 %419
        %v421 = vsel %vm327, %v399, 0.0
        %422 = vadd.xlane.f32.xlu0 %v421
        %v423 = vpop.xlane.xlu0 %422
        %v424 = vmul.f32 %v312, %v312
        %v425 = vmul.f32 %v314, %v314
        %v426 = vmul.f32 %v316, %v316
        %v427 = vmul.f32 %v318, %v318
        %v428 = vmul.f32 %v320, %v320
        %v429 = vmul.f32 %v322, %v322
        %v430 = vmul.f32 %v324, %v324
        %v431 = vmul.f32 %v326, %v326
        %v432 = vsel %vm327, %v424, 0.0
        %433 = vadd.xlane.f32.xlu0 %v432
        %v434 = vpop.xlane.xlu0 %433
        %v435 = vsel %vm327, %v425, 0.0
        %436 = vadd.xlane.f32.xlu0 %v435
        %v437 = vpop.xlane.xlu0 %436
        %v438 = vsel %vm327, %v426, 0.0
        %439 = vadd.xlane.f32.xlu0 %v438
        %v440 = vpop.xlane.xlu0 %439
        %v441 = vsel %vm327, %v427, 0.0
        %442 = vadd.xlane.f32.xlu0 %v441
        %v443 = vpop.xlane.xlu0 %442
        %v444 = vsel %vm327, %v428, 0.0
        %445 = vadd.xlane.f32.xlu0 %v444
        %v446 = vpop.xlane.xlu0 %445
        %v447 = vsel %vm327, %v429, 0.0
        %448 = vadd.xlane.f32.xlu0 %v447
        %v449 = vpop.xlane.xlu0 %448
        %v450 = vsel %vm327, %v430, 0.0
        %451 = vadd.xlane.f32.xlu0 %v450
        %v452 = vpop.xlane.xlu0 %451
        %v453 = vsel %vm327, %v431, 0.0
        %454 = vadd.xlane.f32.xlu0 %v453
        %v455 = vpop.xlane.xlu0 %454
        %v456 = vadd.f32 %v402, %v434
        %v457 = vadd.f32 %v405, %v437
        %v458 = vadd.f32 %v408, %v440
        %v459 = vadd.f32 %v411, %v443
        %v460 = vadd.f32 %v414, %v446
        %v461 = vadd.f32 %v417, %v449
        %v462 = vadd.f32 %v420, %v452
        %v463 = vadd.f32 %v423, %v455
        %v464 = vmul.f32 %v456, 0.0078125
        %v465 = vmul.f32 %v457, 0.0078125
        %v466 = vmul.f32 %v458, 0.0078125
        %v467 = vmul.f32 %v459, 0.0078125
        %v468 = vmul.f32 %v460, 0.0078125
        %v469 = vmul.f32 %v461, 0.0078125
        %v470 = vmul.f32 %v462, 0.0078125
        %v471 = vmul.f32 %v463, 0.0078125
        %v472 = vmul.f32 %v384, %v384
        %v473 = vmul.f32 %v385, %v385
        %v474 = vmul.f32 %v386, %v386
        %v475 = vmul.f32 %v387, %v387
        %v476 = vmul.f32 %v388, %v388
        %v477 = vmul.f32 %v389, %v389
        %v478 = vmul.f32 %v390, %v390
        %v479 = vmul.f32 %v391, %v391
        %v480 = vsub.f32 %v464, %v472
        %v481 = vsub.f32 %v465, %v473
        %v482 = vsub.f32 %v466, %v474
        %v483 = vsub.f32 %v467, %v475
        %v484 = vsub.f32 %v468, %v476
        %v485 = vsub.f32 %v469, %v477
        %v486 = vsub.f32 %v470, %v478
        %v487 = vsub.f32 %v471, %v479
        %v488 = vmax.f32 %v480, 0.0
        %v489 = vmax.f32 %v481, 0.0
        %v490 = vmax.f32 %v482, 0.0
        %v491 = vmax.f32 %v483, 0.0
        %v492 = vmax.f32 %v484, 0.0
        %v493 = vmax.f32 %v485, 0.0
        %v494 = vmax.f32 %v486, 0.0
        %v495 = vmax.f32 %v487, 0.0
        %v496 = vadd.f32 %v488, 1e-05
        %v497 = vadd.f32 %v489, 1e-05
        %v498 = vadd.f32 %v490, 1e-05
        %v499 = vadd.f32 %v491, 1e-05
        %v500 = vadd.f32 %v492, 1e-05
        %v501 = vadd.f32 %v493, 1e-05
        %v502 = vadd.f32 %v494, 1e-05
        %v503 = vadd.f32 %v495, 1e-05
        %v504 = vrsqrt.pop %v496
        %v505 = vrsqrt.pop %v497
        %v506 = vrsqrt.pop %v498
        %v507 = vrsqrt.pop %v499
        %v508 = vrsqrt.pop %v500
        %v509 = vrsqrt.pop %v501
        %v510 = vrsqrt.pop %v502
        %v511 = vrsqrt.pop %v503
        %v512 = vsub.f32 %v311, %v384
        %v513 = vsub.f32 %v313, %v385
        %v514 = vsub.f32 %v315, %v386
        %v515 = vsub.f32 %v317, %v387
        %v516 = vsub.f32 %v319, %v388
        %v517 = vsub.f32 %v321, %v389
        %v518 = vsub.f32 %v323, %v390
        %v519 = vsub.f32 %v325, %v391
        %v520 = vmul.f32 %v512, %v504
        %v521 = vmul.f32 %v513, %v505
        %v522 = vmul.f32 %v514, %v506
        %v523 = vmul.f32 %v515, %v507
        %v524 = vmul.f32 %v516, %v508
        %v525 = vmul.f32 %v517, %v509
        %v526 = vmul.f32 %v518, %v510
        %v527 = vmul.f32 %v519, %v511
        %v528 = vld [vmem:[%s3] sm:$0x1]
        %v530 = vlaneseq
        %v531 = vshrl.u32 %v530, 7
        %v532 = vsub.s32 0, %v531
        %v533 = vrot.slane %v528, %v532
        %v535 = vmul.f32 %v520, %v533
        %v536 = vmul.f32 %v521, %v533
        %v537 = vmul.f32 %v522, %v533
        %v538 = vmul.f32 %v523, %v533
        %v539 = vmul.f32 %v524, %v533
        %v540 = vmul.f32 %v525, %v533
        %v541 = vmul.f32 %v526, %v533
        %v542 = vmul.f32 %v527, %v533
        %v543 = vld [vmem:[%s5] sm:$0x1]
        %v545 = vlaneseq
        %v546 = vshrl.u32 %v545, 7
        %v547 = vsub.s32 0, %v546
        %v548 = vrot.slane %v543, %v547
        %v550 = vadd.f32 %v535, %v548
        %v551 = vadd.f32 %v536, %v548
        %v552 = vadd.f32 %v537, %v548
        %v553 = vadd.f32 %v538, %v548
        %v554 = vadd.f32 %v539, %v548
        %v555 = vadd.f32 %v540, %v548
        %v556 = vadd.f32 %v541, %v548
        %v557 = vadd.f32 %v542, %v548
        %v558 = vsub.f32 %v312, %v384
        %v559 = vsub.f32 %v314, %v385
        %v560 = vsub.f32 %v316, %v386
        %v561 = vsub.f32 %v318, %v387
        %v562 = vsub.f32 %v320, %v388
        %v563 = vsub.f32 %v322, %v389
        %v564 = vsub.f32 %v324, %v390
        %v565 = vsub.f32 %v326, %v391
        %v566 = vmul.f32 %v558, %v504
        %v567 = vmul.f32 %v559, %v505
        %v568 = vmul.f32 %v560, %v506
        %v569 = vmul.f32 %v561, %v507
        %v570 = vmul.f32 %v562, %v508
        %v571 = vmul.f32 %v563, %v509
        %v572 = vmul.f32 %v564, %v510
        %v573 = vmul.f32 %v565, %v511
        %v574 = vld [vmem:[%s4] sm:$0x1]
        %v576 = vlaneseq
        %v577 = vshrl.u32 %v576, 7
        %v578 = vsub.s32 0, %v577
        %v579 = vrot.slane %v574, %v578
        %v581 = vmul.f32 %v566, %v579
        %v582 = vmul.f32 %v567, %v579
        %v583 = vmul.f32 %v568, %v579
        %v584 = vmul.f32 %v569, %v579
        %v585 = vmul.f32 %v570, %v579
        %v586 = vmul.f32 %v571, %v579
        %v587 = vmul.f32 %v572, %v579
        %v588 = vmul.f32 %v573, %v579
        %v589 = vld [vmem:[%s6] sm:$0x1]
        %v591 = vlaneseq
        %v592 = vshrl.u32 %v591, 7
        %v593 = vsub.s32 0, %v592
        %v594 = vrot.slane %v589, %v593
        %v596 = vadd.f32 %v581, %v594
        %v597 = vadd.f32 %v582, %v594
        %v598 = vadd.f32 %v583, %v594
        %v599 = vadd.f32 %v584, %v594
        %v600 = vadd.f32 %v585, %v594
        %v601 = vadd.f32 %v586, %v594
        %v602 = vadd.f32 %v587, %v594
        %v603 = vadd.f32 %v588, %v594
        %v604 = vld [vmem:[%s1] sm:$0xff]
        %v605 = vld [vmem:[%s1 + $0x8] sm:$0xff]
        %v606 = vld [vmem:[%s1 + $0x10] sm:$0xff]
        %v607 = vld [vmem:[%s1 + $0x18] sm:$0xff]
        %v608 = vld [vmem:[%s1 + $0x20] sm:$0xff]
        %v609 = vld [vmem:[%s1 + $0x28] sm:$0xff]
        %v610 = vld [vmem:[%s1 + $0x30] sm:$0xff]
        %v611 = vld [vmem:[%s1 + $0x38] sm:$0xff]
        %v612 = vld [vmem:[%s2] sm:$0xff]
        %v613 = vld [vmem:[%s2 + $0x8] sm:$0xff]
        %v614 = vld [vmem:[%s2 + $0x10] sm:$0xff]
        %v615 = vld [vmem:[%s2 + $0x18] sm:$0xff]
        %v616 = vld [vmem:[%s2 + $0x20] sm:$0xff]
        %v617 = vld [vmem:[%s2 + $0x28] sm:$0xff]
        %v618 = vld [vmem:[%s2 + $0x30] sm:$0xff]
        %v619 = vld [vmem:[%s2 + $0x38] sm:$0xff]
        %v621 = vsel %vm327, %v596, 0
        %v624 = vsel %vm327, %v597, 0
        %v627 = vsel %vm327, %v598, 0
        %v630 = vsel %vm327, %v599, 0
        %v633 = vsel %vm327, %v600, 0
        %v636 = vsel %vm327, %v601, 0
        %v639 = vsel %vm327, %v602, 0
        %v642 = vsel %vm327, %v603, 0
        %644 = vmatprep.subr.mxu0 0.0
        %645 = vmatpush1.msra.mxu0 %v612
        %646 = vmatprep.subr.mxu0 0.0
        %647 = vmatpush1.msra.mxu0 %v613
        %648 = vmatprep.subr.mxu0 0.0
        %649 = vmatpush1.msra.mxu0 %v614
        %650 = vmatprep.subr.mxu0 0.0
        %651 = vmatpush1.msra.mxu0 %v615
        %652 = vmatprep.subr.mxu0 0.0
        %653 = vmatpush1.msra.mxu0 %v616
        %654 = vmatprep.subr.mxu0 0.0
        %655 = vmatpush1.msra.mxu0 %v617
        %656 = vmatprep.subr.mxu0 0.0
        %657 = vmatpush1.msra.mxu0 %v618
        %658 = vmatprep.subr.mxu0 0.0
        %659 = vmatpush1.msra.mxu0 %v619
        %660 = vmatprep.subr.mxu0 0.0
        %661 = vmatpush1.msra.mxu0 0.0
        %662 = vmatprep.subr.mxu0 0.0
        %663 = vmatpush1.msra.mxu0 0.0
        %664 = vmatprep.subr.mxu0 0.0
        %665 = vmatpush1.msra.mxu0 0.0
        %666 = vmatprep.subr.mxu0 0.0
        %667 = vmatpush1.msra.mxu0 0.0
        %668 = vmatprep.subr.mxu0 0.0
        %669 = vmatpush1.msra.mxu0 0.0
        %670 = vmatprep.subr.mxu0 0.0
        %671 = vmatpush1.msra.mxu0 0.0
        %672 = vmatprep.subr.mxu0 0.0
        %673 = vmatpush1.msra.mxu0 0.0
        %674 = vmatprep.subr.mxu0 0.0
        %675 = vmatpush1.msra.mxu0 0.0
        %676 = vmatprep.subr.mxu0 0.0
        %677 = vmatpush1.msra.mxu0 0.0
        %678 = vmatprep.subr.mxu0 0.0
        %679 = vmatpush1.msra.mxu0 0.0
        %680 = vmatprep.subr.mxu0 0.0
        %681 = vmatpush1.msra.mxu0 0.0
        %682 = vmatprep.subr.mxu0 0.0
        %683 = vmatpush1.msra.mxu0 0.0
        %684 = vmatprep.subr.mxu0 0.0
        %685 = vmatpush1.msra.mxu0 0.0
        %686 = vmatprep.subr.mxu0 0.0
        %687 = vmatpush1.msra.mxu0 0.0
        %688 = vmatprep.subr.mxu0 0.0
        %689 = vmatpush1.msra.mxu0 0.0
        %690 = vmatprep.subr.mxu0 0.0
        %691 = vmatpush1.msra.mxu0 0.0
        %692 = vmatprep.subr.mxu0 0.0
        %693 = vmatpush1.msra.mxu0 0.0
        %694 = vmatprep.subr.mxu0 0.0
        %695 = vmatpush1.msra.mxu0 0.0
        %696 = vmatprep.subr.mxu0 0.0
        %697 = vmatpush1.msra.mxu0 0.0
        %698 = vmatprep.subr.mxu0 0.0
        %699 = vmatpush1.msra.mxu0 0.0
        %700 = vmatprep.subr.mxu0 0.0
        %701 = vmatpush1.msra.mxu0 0.0
        %702 = vmatprep.subr.mxu0 0.0
        %703 = vmatpush1.msra.mxu0 0.0
        %704 = vmatprep.subr.mxu0 0.0
        %705 = vmatpush1.msra.mxu0 0.0
        %706 = vmatprep.subr.mxu0 0.0
        %707 = vmatpush1.msra.mxu0 0.0
        %708 = vmatprep.mubr.f32.mxu0 0.0
        %709 = vmatmul.mubr.f32.gmra.mrb[0].mxu0 %v621
        %v710 = vpop.f32.mrb[0].mxu0
        %v711 = vadd.f32 0.0, %v710
        %v712 = vpop.f32.mrb[0].mxu0
        %713 = vmatprep.mubr.f32.mxu0 0.0
        %714 = vmatmul.mubr.f32.gmra.mrb[0].mxu0 %v624
        %v715 = vpop.f32.mrb[0].mxu0
        %v716 = vadd.f32 0.0, %v715
        %v717 = vpop.f32.mrb[0].mxu0
        %718 = vmatprep.mubr.f32.mxu0 0.0
        %719 = vmatmul.mubr.f32.gmra.mrb[0].mxu0 %v627
        %v720 = vpop.f32.mrb[0].mxu0
        %v721 = vadd.f32 0.0, %v720
        %v722 = vpop.f32.mrb[0].mxu0
        %723 = vmatprep.mubr.f32.mxu0 0.0
        %724 = vmatmul.mubr.f32.gmra.mrb[0].mxu0 %v630
        %v725 = vpop.f32.mrb[0].mxu0
        %v726 = vadd.f32 0.0, %v725
        %v727 = vpop.f32.mrb[0].mxu0
        %728 = vmatprep.mubr.f32.mxu0 0.0
        %729 = vmatmul.mubr.f32.gmra.mrb[0].mxu0 %v633
        %v730 = vpop.f32.mrb[0].mxu0
        %v731 = vadd.f32 0.0, %v730
        %v732 = vpop.f32.mrb[0].mxu0
        %733 = vmatprep.mubr.f32.mxu0 0.0
        %734 = vmatmul.mubr.f32.gmra.mrb[0].mxu0 %v636
        %v735 = vpop.f32.mrb[0].mxu0
        %v736 = vadd.f32 0.0, %v735
        %v737 = vpop.f32.mrb[0].mxu0
        %738 = vmatprep.mubr.f32.mxu0 0.0
        %739 = vmatmul.mubr.f32.gmra.mrb[0].mxu0 %v639
        %v740 = vpop.f32.mrb[0].mxu0
        %v741 = vadd.f32 0.0, %v740
        %v742 = vpop.f32.mrb[0].mxu0
        %743 = vmatprep.mubr.f32.mxu0 0.0
        %744 = vmatmul.mubr.f32.gmra.mrb[0].mxu0 %v642
        %v745 = vpop.f32.mrb[0].mxu0
        %v746 = vadd.f32 0.0, %v745
        %v747 = vpop.f32.mrb[0].mxu0
        %748 = vdwg.mxu0
        %v750 = vsel %vm327, %v550, 0
        %v753 = vsel %vm327, %v551, 0
        %v756 = vsel %vm327, %v552, 0
        %v759 = vsel %vm327, %v553, 0
        %v762 = vsel %vm327, %v554, 0
        %v765 = vsel %vm327, %v555, 0
        %v768 = vsel %vm327, %v556, 0
        %v771 = vsel %vm327, %v557, 0
        %773 = vmatprep.subr.mxu0 0.0
        %774 = vmatpush1.msra.mxu0 %v604
        %775 = vmatprep.subr.mxu0 0.0
        %776 = vmatpush1.msra.mxu0 %v605
        %777 = vmatprep.subr.mxu0 0.0
        %778 = vmatpush1.msra.mxu0 %v606
        %779 = vmatprep.subr.mxu0 0.0
        %780 = vmatpush1.msra.mxu0 %v607
        %781 = vmatprep.subr.mxu0 0.0
        %782 = vmatpush1.msra.mxu0 %v608
        %783 = vmatprep.subr.mxu0 0.0
        %784 = vmatpush1.msra.mxu0 %v609
        %785 = vmatprep.subr.mxu0 0.0
        %786 = vmatpush1.msra.mxu0 %v610
        %787 = vmatprep.subr.mxu0 0.0
        %788 = vmatpush1.msra.mxu0 %v611
        %789 = vmatprep.subr.mxu0 0.0
        %790 = vmatpush1.msra.mxu0 0.0
        %791 = vmatprep.subr.mxu0 0.0
        %792 = vmatpush1.msra.mxu0 0.0
        %793 = vmatprep.subr.mxu0 0.0
        %794 = vmatpush1.msra.mxu0 0.0
        %795 = vmatprep.subr.mxu0 0.0
        %796 = vmatpush1.msra.mxu0 0.0
        %797 = vmatprep.subr.mxu0 0.0
        %798 = vmatpush1.msra.mxu0 0.0
        %799 = vmatprep.subr.mxu0 0.0
        %800 = vmatpush1.msra.mxu0 0.0
        %801 = vmatprep.subr.mxu0 0.0
        %802 = vmatpush1.msra.mxu0 0.0
        %803 = vmatprep.subr.mxu0 0.0
        %804 = vmatpush1.msra.mxu0 0.0
        %805 = vmatprep.subr.mxu0 0.0
        %806 = vmatpush1.msra.mxu0 0.0
        %807 = vmatprep.subr.mxu0 0.0
        %808 = vmatpush1.msra.mxu0 0.0
        %809 = vmatprep.subr.mxu0 0.0
        %810 = vmatpush1.msra.mxu0 0.0
        %811 = vmatprep.subr.mxu0 0.0
        %812 = vmatpush1.msra.mxu0 0.0
        %813 = vmatprep.subr.mxu0 0.0
        %814 = vmatpush1.msra.mxu0 0.0
        %815 = vmatprep.subr.mxu0 0.0
        %816 = vmatpush1.msra.mxu0 0.0
        %817 = vmatprep.subr.mxu0 0.0
        %818 = vmatpush1.msra.mxu0 0.0
        %819 = vmatprep.subr.mxu0 0.0
        %820 = vmatpush1.msra.mxu0 0.0
        %821 = vmatprep.subr.mxu0 0.0
        %822 = vmatpush1.msra.mxu0 0.0
        %823 = vmatprep.subr.mxu0 0.0
        %824 = vmatpush1.msra.mxu0 0.0
        %825 = vmatprep.subr.mxu0 0.0
        %826 = vmatpush1.msra.mxu0 0.0
        %827 = vmatprep.subr.mxu0 0.0
        %828 = vmatpush1.msra.mxu0 0.0
        %829 = vmatprep.subr.mxu0 0.0
        %830 = vmatpush1.msra.mxu0 0.0
        %831 = vmatprep.subr.mxu0 0.0
        %832 = vmatpush1.msra.mxu0 0.0
        %833 = vmatprep.subr.mxu0 0.0
        %834 = vmatpush1.msra.mxu0 0.0
        %835 = vmatprep.subr.mxu0 0.0
        %836 = vmatpush1.msra.mxu0 0.0
        %837 = vmatprep.mubr.f32.mxu0 0.0
        %838 = vmatmul.mubr.f32.gmra.mrb[0].mxu0 %v750
        %v839 = vpop.f32.mrb[0].mxu0
        %v840 = vadd.f32 %v711, %v839
        %v841 = vpop.f32.mrb[0].mxu0
        %842 = vmatprep.mubr.f32.mxu0 0.0
        %843 = vmatmul.mubr.f32.gmra.mrb[0].mxu0 %v753
        %v844 = vpop.f32.mrb[0].mxu0
        %v845 = vadd.f32 %v716, %v844
        %v846 = vpop.f32.mrb[0].mxu0
        %847 = vmatprep.mubr.f32.mxu0 0.0
        %848 = vmatmul.mubr.f32.gmra.mrb[0].mxu0 %v756
        %v849 = vpop.f32.mrb[0].mxu0
        %v850 = vadd.f32 %v721, %v849
        %v851 = vpop.f32.mrb[0].mxu0
        %852 = vmatprep.mubr.f32.mxu0 0.0
        %853 = vmatmul.mubr.f32.gmra.mrb[0].mxu0 %v759
        %v854 = vpop.f32.mrb[0].mxu0
        %v855 = vadd.f32 %v726, %v854
        %v856 = vpop.f32.mrb[0].mxu0
        %857 = vmatprep.mubr.f32.mxu0 0.0
        %858 = vmatmul.mubr.f32.gmra.mrb[0].mxu0 %v762
        %v859 = vpop.f32.mrb[0].mxu0
        %v860 = vadd.f32 %v731, %v859
        %v861 = vpop.f32.mrb[0].mxu0
        %862 = vmatprep.mubr.f32.mxu0 0.0
        %863 = vmatmul.mubr.f32.gmra.mrb[0].mxu0 %v765
        %v864 = vpop.f32.mrb[0].mxu0
        %v865 = vadd.f32 %v736, %v864
        %v866 = vpop.f32.mrb[0].mxu0
        %867 = vmatprep.mubr.f32.mxu0 0.0
        %868 = vmatmul.mubr.f32.gmra.mrb[0].mxu0 %v768
        %v869 = vpop.f32.mrb[0].mxu0
        %v870 = vadd.f32 %v741, %v869
        %v871 = vpop.f32.mrb[0].mxu0
        %872 = vmatprep.mubr.f32.mxu0 0.0
        %873 = vmatmul.mubr.f32.gmra.mrb[0].mxu0 %v771
        %v874 = vpop.f32.mrb[0].mxu0
        %v875 = vadd.f32 %v746, %v874
        %v876 = vpop.f32.mrb[0].mxu0
        %877 = vdwg.mxu0
        %878 = vst.msk [vmem:[%s298] sm:$0xff] %vm327, %v840
        %879 = vst.msk [vmem:[%s298 + $0x8] sm:$0xff] %vm327, %v845
        %880 = vst.msk [vmem:[%s298 + $0x10] sm:$0xff] %vm327, %v850
        %881 = vst.msk [vmem:[%s298 + $0x18] sm:$0xff] %vm327, %v855
        %882 = vst.msk [vmem:[%s298 + $0x20] sm:$0xff] %vm327, %v860
        %883 = vst.msk [vmem:[%s298 + $0x28] sm:$0xff] %vm327, %v865
        %884 = vst.msk [vmem:[%s298 + $0x30] sm:$0xff] %vm327, %v870
        %885 = vst.msk [vmem:[%s298 + $0x38] sm:$0xff] %vm327, %v875
        %s886 = sand.u32 %s197, 1
        %s887 = scalar_lea.sflag [#allocation3], %s886
        %s888 = sand.u32 %s197, 1
        %s889 = smul.addr %s888, 64
        %s890 = scalar_lea.vmem [#allocation2], %s889
        // Predicated region
        $region49: #{patch_merging_pallas.1} parent=47 // pred_check
          %p891 = pneg %p207
        $region50: #{patch_merging_pallas.1} parent=47 // pred_check_branch
          %893 = sbr.rel (%p891) target = $region52
        $region51: #{patch_merging_pallas.1} parent=47 // pred_region
          %s894 = smul.u32 8, %s26
          %s896 = ssub.s32 1024, 1024
          %897 = vsyncadd %s887, %s896
          %s898 = smul.addr %s25, 8
          %s899 = sadd.s32 %s894, %s898
          %s900 = smul.addr %s899, 128
          %s901 = scalar_lea.hbm %s7, %s900
          %s902 = sshll.u32 %s890, 4
          %s903 = int_to_ptr.vmem [resolvable:$true] %s902
          %908 = dma.vmem_to_hbm [thread:$0]  %s903, 1024, %s901, %s887, 128, 128, 8
        $region52: #{patch_merging_pallas.1} parent=47 // pred_fallthru
          _
      $region48: #{patch_merging_pallas.1} parent=5 // pred_fallthru
        _
      %p909 = scmp.le.s32.totalorder 2, %s16
      // Predicated region
      $region53: #{patch_merging_pallas.1} parent=5 // pred_check
        %p910 = pneg %p909
      $region54: #{patch_merging_pallas.1} parent=5 // pred_check_branch
        %912 = sbr.rel (%p910) target = $region56
      $region55: #{patch_merging_pallas.1} parent=5 // pred_region
        %s913 = ssub.s32 %s16, 2
        // Predicated region
        $region57: #{patch_merging_pallas.1} parent=55 // pred_check
          %p914 = pneg %p213
        $region58: #{patch_merging_pallas.1} parent=55 // pred_check_branch
          %916 = sbr.rel (%p914) target = $region60
        $region59: #{patch_merging_pallas.1} parent=55 // pred_region
          %s917 = sand.u32 %s198, 1
          %s918 = scalar_lea.sflag [#allocation3], %s917
          %s919 = sand.u32 %s198, 1
          %s920 = smul.addr %s919, 64
          %s921 = scalar_lea.vmem [#allocation2], %s920
          %922 = dma.done %s918, 1024
        $region60: #{patch_merging_pallas.1} parent=55 // pred_fallthru
          _
      $region56: #{patch_merging_pallas.1} parent=5 // pred_fallthru
        _
    $region6: #{patch_merging_pallas.1} parent=1 // loop_footer
      %s20 = sadd.s32 1, %s16
    $region7: #{patch_merging_pallas.1} parent=1 // loop_footer_branch
      %15 = sbr.rel target = $region3
    $region8: #{patch_merging_pallas.1} parent=1 // loop_exit
      _
    %923 = vsyncpa [#allocation3], 1
    %s924 = scalar_lea.sflag [#allocation3], 1
    %925 = vsyncpa %s924, 1

</llo_original>
